<compile_context>
chip_gen: v6e
topology: v6e:2x2x1
jax: 0.10.0
libtpu: 0.0.40
codegen_flags: <defaults>
</compile_context>

<pallas_src>
import functools

import jax
import jax.numpy as jnp
from jax.experimental import pallas as pl
from jax.experimental.pallas import tpu as pltpu


def _com2d_kernel(wx_ref, wy_ref, x_ref, o_ref, *, indexing, eps):
    """One block of NB batch samples per grid step.

    wx_ref, wy_ref: (1, H*W)    flattened coordinate weights (f32)
    x_ref:          (NB, C, H*W) input block (lane-dense flattened spatial axis)
    o_ref:          (NB, 2, C)   [coord0, coord1] rows, C on the lane axis
    """
    x = jnp.maximum(x_ref[...].astype(jnp.float32), 0.0)          # ReLU, (NB, C, L)
    wx = wx_ref[...].reshape(1, 1, -1)                             # broadcast rows
    wy = wy_ref[...].reshape(1, 1, -1)

    total = jnp.sum(x, axis=-1) + eps                              # (NB, C) shared mass
    sx = jnp.sum(x * wx, axis=-1)                                  # (NB, C)
    sy = jnp.sum(x * wy, axis=-1)                                  # (NB, C)

    inv = 1.0 / total                                              # one divide, reused
    cx = sx * inv * 2.0 - 1.0
    cy = sy * inv * 2.0 - 1.0

    first, second = (cx, cy) if indexing == 'xy' else (cy, cx)
    out = jnp.concatenate([first[:, None, :], second[:, None, :]], axis=1)  # (NB, 2, C)
    o_ref[...] = out.astype(o_ref.dtype)


def _vmem_limit_bytes():
    """Generation-aware scoped VMEM limit (leaves ~25% headroom)."""
    cap = 64 << 20
    try:
        cap = int(getattr(pltpu.get_tpu_info(), "vmem_capacity_bytes", cap))
    except Exception:
        pass
    return max(32 << 20, (cap * 3) // 4)


def _pick_batch_block(n, c, l, itemsize, vmem_budget):
    """Largest divisor of N whose block (plus temporaries) fits the VMEM budget."""
    # Resident bytes per sample: double-buffered input + f32 ReLU copy + two
    # weighted-product temporaries (conservative).
    per_sample = c * l * (2 * itemsize + 3 * 4)
    target = min(vmem_budget // 4, 8 << 20)
    nb_max = max(1, target // max(per_sample, 1))
    if n >= 2:
        nb_max = min(nb_max, max(1, n // 2))   # keep >=2 grid steps for megacore
    nb_max = min(nb_max, n)
    for d in range(int(nb_max), 0, -1):
        if n % d == 0:
            return d
    return 1


def center_of_mass_2d(img, *, indexing='xy', eps=1e-8):
    """Pallas CenterOfMass2d forward.  img: (N, C, H, W) -> (N, C, 2)."""
    assert indexing in ('xy', 'ij')
    N, C, H, W = img.shape
    L = H * W
    itemsize = jnp.dtype(img.dtype).itemsize

    # Free view for contiguous NCHW: flattened spatial axis becomes the lane axis.
    x = img.reshape(N, C, L)

    # torch.linspace(0, 1, n) weights, flattened to (1, H*W) rows (f32, exact).
    wx = jnp.tile(jnp.linspace(0.0, 1.0, W, dtype=jnp.float32), H).reshape(1, L)
    wy = jnp.repeat(jnp.linspace(0.0, 1.0, H, dtype=jnp.float32), W).reshape(1, L)

    vmem_limit = _vmem_limit_bytes()
    nb = _pick_batch_block(N, C, L, itemsize, vmem_limit)
    # TODO(synk): if a single sample's C*H*W block ever exceeds the v7x budget,
    # add an inner L-band grid axis marked "arbitrary" with partial-sum scratch.

    kernel = functools.partial(_com2d_kernel, indexing=indexing, eps=eps)
    cost = pl.CostEstimate(
        flops=6 * N * C * L,
        transcendentals=0,
        bytes_accessed=N * C * L * itemsize + N * C * 2 * itemsize + 2 * L * 4,
    )

    out_t = pl.pallas_call(
        kernel,
        out_shape=jax.ShapeDtypeStruct((N, 2, C), img.dtype),
        grid_spec=pltpu.PrefetchScalarGridSpec(
            num_scalar_prefetch=0,
            grid=(N // nb,),
            in_specs=[
                pl.BlockSpec((1, L), lambda n: (0, 0)),            # wx (constant)
                pl.BlockSpec((1, L), lambda n: (0, 0)),            # wy (constant)
                pl.BlockSpec((nb, C, L), lambda n: (n, 0, 0)),     # image block
            ],
            out_specs=pl.BlockSpec((nb, 2, C), lambda n: (n, 0, 0)),
        ),
        compiler_params=pltpu.CompilerParams(
            dimension_semantics=("parallel",),
            vmem_limit_bytes=vmem_limit,
        ),
        cost_estimate=cost,
    )(wx, wy, x)

    # Tiny (N*C*2 element) transpose back to the module's (N, C, 2) layout.
    return jnp.transpose(out_t, (0, 2, 1))


def _reference(img, indexing='xy'):
    """Pure-JAX reference mirroring the PyTorch forward."""
    img = jnp.maximum(img, 0.0)
    n_batch, chs, dimy, dimx = img.shape
    eps = 1e-8
    arangex = jnp.linspace(0.0, 1.0, dimx).reshape(1, 1, -1)
    arangey = jnp.linspace(0.0, 1.0, dimy).reshape(1, 1, -1)
    mx = img.sum(axis=-2)
    Mx = mx.sum(axis=-1, keepdims=True) + eps
    my = img.sum(axis=-1)
    My = my.sum(axis=-1, keepdims=True) + eps
    cx = (arangex * mx).sum(axis=-1, keepdims=True) / Mx
    cy = (arangey * my).sum(axis=-1, keepdims=True) / My
    if indexing == 'xy':
        return jnp.concatenate([cx, cy], axis=-1) * 2 - 1
    return jnp.concatenate([cy, cx], axis=-1) * 2 - 1


if __name__ == "__main__":
    key = jax.random.PRNGKey(0)
    N, C, H, W = 2, 4, 16, 16
    x = jax.random.normal(key, (N, C, H, W), jnp.float32)

    for indexing in ('xy', 'ij'):
        out = jax.block_until_ready(center_of_mass_2d(x, indexing=indexing))
        ref = _reference(x, indexing=indexing)
        assert out.shape == ref.shape == (N, C, 2), out.shape
        assert jnp.allclose(out, ref, atol=1e-5, rtol=1e-5), \
            float(jnp.max(jnp.abs(out - ref)))

    print("KERNEL_OK")
</pallas_src>

<mosaic_0001>
module attributes {stable_mosaic.version = 11 : i64} {
  func.func @_com2d_kernel(%arg0: i32, %arg1: memref<1x256xf32, #tpu.memory_space<vmem>>, %arg2: memref<1x256xf32, #tpu.memory_space<vmem>>, %arg3: memref<1x4x256xf32, #tpu.memory_space<vmem>>, %arg4: memref<1x2x4xf32, #tpu.memory_space<vmem>>) attributes {dimension_semantics = [#tpu.dimension_semantics<parallel>], iteration_bounds = array<i64: 2>, scalar_prefetch = 0 : i64, scratch_operands = 0 : i64, tpu.core_type = #tpu.core_type<tc>, window_params = [{pipeline_mode = #tpu.pipeline_mode<synchronous>, transform_indices = @transform_0, window_bounds = array<i64: 1, 256>}, {pipeline_mode = #tpu.pipeline_mode<synchronous>, transform_indices = @transform_1, window_bounds = array<i64: 1, 256>}, {transform_indices = @transform_2, window_bounds = array<i64: 1, 4, 256>}, {transform_indices = @transform_3, window_bounds = array<i64: 1, 2, 4>}]} {
    %c0 = arith.constant 0 : index
    %c0_0 = arith.constant 0 : index
    %c0_1 = arith.constant 0 : index
    %0 = vector.load %arg3[%c0, %c0_0, %c0_1] : memref<1x4x256xf32, #tpu.memory_space<vmem>>, vector<1x4x256xf32>
    %cst = arith.constant 0.000000e+00 : f32
    %1 = vector.broadcast %cst : f32 to vector<1x4x256xf32>
    %2 = arith.maximumf %0, %1 : vector<1x4x256xf32>
    %c0_2 = arith.constant 0 : index
    %c0_3 = arith.constant 0 : index
    %3 = vector.load %arg1[%c0_2, %c0_3] : memref<1x256xf32, #tpu.memory_space<vmem>>, vector<1x256xf32>
    %4 = vector.shape_cast %3 : vector<1x256xf32> to vector<1x1x256xf32>
    %c0_4 = arith.constant 0 : index
    %c0_5 = arith.constant 0 : index
    %5 = vector.load %arg2[%c0_4, %c0_5] : memref<1x256xf32, #tpu.memory_space<vmem>>, vector<1x256xf32>
    %6 = vector.shape_cast %5 : vector<1x256xf32> to vector<1x1x256xf32>
    %cst_6 = arith.constant dense<0.000000e+00> : vector<1x4xf32>
    %7 = vector.multi_reduction <add>, %2, %cst_6 [2] : vector<1x4x256xf32> to vector<1x4xf32>
    %cst_7 = arith.constant 9.99999993E-9 : f32
    %8 = vector.broadcast %cst_7 : f32 to vector<1x4xf32>
    %9 = arith.addf %7, %8 : vector<1x4xf32>
    %10 = vector.broadcast %4 : vector<1x1x256xf32> to vector<1x4x256xf32>
    %11 = arith.mulf %2, %10 : vector<1x4x256xf32>
    %cst_8 = arith.constant dense<0.000000e+00> : vector<1x4xf32>
    %12 = vector.multi_reduction <add>, %11, %cst_8 [2] : vector<1x4x256xf32> to vector<1x4xf32>
    %13 = vector.broadcast %6 : vector<1x1x256xf32> to vector<1x4x256xf32>
    %14 = arith.mulf %2, %13 : vector<1x4x256xf32>
    %cst_9 = arith.constant dense<0.000000e+00> : vector<1x4xf32>
    %15 = vector.multi_reduction <add>, %14, %cst_9 [2] : vector<1x4x256xf32> to vector<1x4xf32>
    %cst_10 = arith.constant 1.000000e+00 : f32
    %16 = vector.broadcast %cst_10 : f32 to vector<1x4xf32>
    %17 = arith.divf %16, %9 : vector<1x4xf32>
    %18 = arith.mulf %12, %17 : vector<1x4xf32>
    %cst_11 = arith.constant 2.000000e+00 : f32
    %19 = vector.broadcast %cst_11 : f32 to vector<1x4xf32>
    %20 = arith.mulf %18, %19 : vector<1x4xf32>
    %cst_12 = arith.constant 1.000000e+00 : f32
    %21 = vector.broadcast %cst_12 : f32 to vector<1x4xf32>
    %22 = arith.subf %20, %21 : vector<1x4xf32>
    %23 = arith.mulf %15, %17 : vector<1x4xf32>
    %cst_13 = arith.constant 2.000000e+00 : f32
    %24 = vector.broadcast %cst_13 : f32 to vector<1x4xf32>
    %25 = arith.mulf %23, %24 : vector<1x4xf32>
    %cst_14 = arith.constant 1.000000e+00 : f32
    %26 = vector.broadcast %cst_14 : f32 to vector<1x4xf32>
    %27 = arith.subf %25, %26 : vector<1x4xf32>
    %28 = vector.shape_cast %22 : vector<1x4xf32> to vector<1x1x4xf32>
    %29 = vector.shape_cast %27 : vector<1x4xf32> to vector<1x1x4xf32>
    %30 = tpu.concatenate %28, %29 in 1 : vector<1x1x4xf32>, vector<1x1x4xf32> -> vector<1x2x4xf32>
    %c0_15 = arith.constant 0 : index
    %c0_16 = arith.constant 0 : index
    %c0_17 = arith.constant 0 : index
    %31 = vector.load %arg4[%c0_15, %c0_16, %c0_17] : memref<1x2x4xf32, #tpu.memory_space<vmem>>, vector<1x2x4xf32>
    tpu.vector_store %arg4[%c0_15, %c0_16, %c0_17], %30 {strides = array<i32>} : memref<1x2x4xf32, #tpu.memory_space<vmem>>, vector<1x2x4xf32>,
    return
  }
  func.func @transform_0(%arg0: i32) -> (i32, i32) {
    %c0_i32 = arith.constant 0 : i32
    %c0_i32_0 = arith.constant 0 : i32
    %c0_i32_1 = arith.constant 0 : i32
    return %c0_i32, %c0_i32_0 : i32, i32
  }
  func.func @transform_1(%arg0: i32) -> (i32, i32) {
    %c0_i32 = arith.constant 0 : i32
    %c0_i32_0 = arith.constant 0 : i32
    %c0_i32_1 = arith.constant 0 : i32
    return %c0_i32, %c0_i32_0 : i32, i32
  }
  func.func @transform_2(%arg0: i32) -> (i32, i32, i32) {
    %c0_i32 = arith.constant 0 : i32
    %c0_i32_0 = arith.constant 0 : i32
    %c0_i32_1 = arith.constant 0 : i32
    return %arg0, %c0_i32, %c0_i32_0 : i32, i32, i32
  }
  func.func @transform_3(%arg0: i32) -> (i32, i32, i32) {
    %c0_i32 = arith.constant 0 : i32
    %c0_i32_0 = arith.constant 0 : i32
    %c0_i32_1 = arith.constant 0 : i32
    return %arg0, %c0_i32, %c0_i32_0 : i32, i32, i32
  }
}

</mosaic_0001>

<llo_original>
// kernel: tpu_custom_call.1
$region0: #{tpu_custom_call.1}
  #allocation0 [shape = 'u32[]', space=smem, size = 0x4, offset = 0x4, fixed_abs, tag = 'smem constant byte address 0x4 - core index']
  #allocation1 [shape = 'u32[144,128]{1,0:T(1,128)}', space=vmem, size = 0x12000, scoped, tag = 'internal scratch']
  %s0 = inlined_call_operand.hbm [shape: f32[1,256], index: 0, kind: input, shape index: {}]
  %s1 = inlined_call_operand.hbm [shape: f32[1,256], index: 1, kind: input, shape index: {}]
  %s2 = inlined_call_operand.hbm [shape: f32[2,4,256], index: 2, kind: input, shape index: {}]
  %s3 = inlined_call_operand.hbm [shape: f32[2,2,4], index: 3, kind: output, shape index: {}]
  %s4 = sld [smem:[#allocation0]]
  $region57: #{tpu_custom_call.1} parent=0
    _
  %s6 = ssub.s32 1, %s4
  %s7 = scalar_select 0, %s6, %s4
  $region1: #{tpu_custom_call.1} parent=0
    #allocation2 [shape = 'u8[1024]{0}', space=vmem, size = 0x400, scoped, tag = 'input window, operand 0, single buffered']
    #allocation3 [shape = 's32[2]{0}', space=sflag, size = 0x8, scoped, tag = 'scoped memory for tpu_custom_call.1']
    #allocation4 [shape = 's32[2]{0}', space=sflag, size = 0x8, scoped, tag = 'scoped memory for tpu_custom_call.1']
    #allocation5 [shape = 'u8[1024]{0}', space=vmem, size = 0x400, scoped, tag = 'input window, operand 1, single buffered']
    #allocation6 [shape = 's32[1]{0}', space=sflag, size = 0x4, scoped, tag = 'scoped memory for tpu_custom_call.1']
    #allocation7 [shape = 'u8[8192]{0}', space=vmem, size = 0x2000, scoped, tag = 'input window, operand 2']
    #allocation8 [shape = 'u8[2048]{0}', space=vmem, size = 0x800, scoped, tag = 'output window, operand 0']
    %8 = vsyncpa [#allocation3], 0
    %9 = vsyncpa [#allocation6], 0
    %10 = vsyncpa [#allocation4], 0
    %s11 = scalar_lea.sflag [#allocation4], 1
    %12 = vsyncpa %s11, 0
    loop: start=0, step=1, limit=4
    $region2: #{tpu_custom_call.1} parent=1 // loop_pre_header
      _
    $region3: #{tpu_custom_call.1} parent=1 // loop_header
      %s14 = sphi 0, %s18
      %p15 = scmp.ge.s32.totalorder %s14, 4
      %s22 = sphi 0, %s22
      %s24 = sphi 0, %s22
      %s25 = sphi 0, %s24
      %s39 = sphi 0, %s25
      %s43 = sphi 0, %s43
      %s45 = sphi 0, %s43
      %s46 = sphi 0, %s45
      %s60 = sphi 0, %s46
      %s66 = sphi 0, %s68
      %s69 = sphi 0, %s66
      %s70 = sphi 0, %s69
      %s86 = sphi 0, %s70
      %s92 = sphi 0, %s94
      %s95 = sphi 0, %s92
      %s96 = sphi 0, %s95
      %s112 = sphi 0, %s96
    $region4: #{tpu_custom_call.1} parent=1 // loop_header_branch
      %17 = sbr.rel (%p15) target = $region8
    $region5: #{tpu_custom_call.1} parent=1 // loop_body
      %s19 = ssub.s32 %s14, 1
      %s20 = ssub.s32 %s14, 2
      %s21 = sadd.s32 %s14, 1
      %s23 = sadd.s32 %s22, 1
      %p26 = scmp.eq.s32.totalorder %s14, 1
      %p27 = scmp.ne.s32.totalorder %s22, %s24
      %p28 = scmp.eq.s32.totalorder %s14, 0
      %p29 = por %p27, %p28
      %p30 = scmp.ne.s32.totalorder %s22, %s24
      %p31 = scmp.eq.s32.totalorder %s19, 1
      %p32 = por %p30, %p31
      %p33 = scmp.ne.s32.totalorder %s24, %s25
      %p34 = scmp.eq.s32.totalorder %s19, 0
      %p35 = por %p33, %p34
      %p36 = scmp.ne.s32.totalorder %s24, %s25
      %p37 = scmp.eq.s32.totalorder %s20, 1
      %p38 = por %p36, %p37
      %p40 = scmp.ne.s32.totalorder %s25, %s39
      %p41 = scmp.eq.s32.totalorder %s20, 0
      %p42 = por %p40, %p41
      %s44 = sadd.s32 %s43, 1
      %p47 = scmp.eq.s32.totalorder %s14, 1
      %p48 = scmp.ne.s32.totalorder %s43, %s45
      %p49 = scmp.eq.s32.totalorder %s14, 0
      %p50 = por %p48, %p49
      %p51 = scmp.ne.s32.totalorder %s43, %s45
      %p52 = scmp.eq.s32.totalorder %s19, 1
      %p53 = por %p51, %p52
      %p54 = scmp.ne.s32.totalorder %s45, %s46
      %p55 = scmp.eq.s32.totalorder %s19, 0
      %p56 = por %p54, %p55
      %p57 = scmp.ne.s32.totalorder %s45, %s46
      %p58 = scmp.eq.s32.totalorder %s20, 1
      %p59 = por %p57, %p58
      %p61 = scmp.ne.s32.totalorder %s46, %s60
      %p62 = scmp.eq.s32.totalorder %s20, 0
      %p63 = por %p61, %p62
      %s64 = ssub.s32 %s14, %s21
      %p65 = scmp.eq.s32.totalorder %s64, 0
      %s67 = sadd.s32 %s66, 1
      %s68 = scalar_select %p65, %s66, %s67
      %p71 = pneg %p65
      %p72 = scmp.eq.s32.totalorder %s14, 1
      %p73 = por %p71, %p72
      %p74 = scmp.ne.s32.totalorder %s66, %s69
      %p75 = scmp.eq.s32.totalorder %s14, 0
      %p76 = por %p74, %p75
      %p77 = scmp.ne.s32.totalorder %s66, %s69
      %p78 = scmp.eq.s32.totalorder %s19, 1
      %p79 = por %p77, %p78
      %p80 = scmp.ne.s32.totalorder %s69, %s70
      %p81 = scmp.eq.s32.totalorder %s19, 0
      %p82 = por %p80, %p81
      %p83 = scmp.ne.s32.totalorder %s69, %s70
      %p84 = scmp.eq.s32.totalorder %s20, 1
      %p85 = por %p83, %p84
      %p87 = scmp.ne.s32.totalorder %s70, %s86
      %p88 = scmp.eq.s32.totalorder %s20, 0
      %p89 = por %p87, %p88
      %s90 = ssub.s32 %s14, %s21
      %p91 = scmp.eq.s32.totalorder %s90, 0
      %s93 = sadd.s32 %s92, 1
      %s94 = scalar_select %p91, %s92, %s93
      %p97 = pneg %p91
      %p98 = scmp.eq.s32.totalorder %s14, 1
      %p99 = por %p97, %p98
      %p100 = scmp.ne.s32.totalorder %s92, %s95
      %p101 = scmp.eq.s32.totalorder %s14, 0
      %p102 = por %p100, %p101
      %p103 = scmp.ne.s32.totalorder %s92, %s95
      %p104 = scmp.eq.s32.totalorder %s19, 1
      %p105 = por %p103, %p104
      %p106 = scmp.ne.s32.totalorder %s95, %s96
      %p107 = scmp.eq.s32.totalorder %s19, 0
      %p108 = por %p106, %p107
      %p109 = scmp.ne.s32.totalorder %s95, %s96
      %p110 = scmp.eq.s32.totalorder %s20, 1
      %p111 = por %p109, %p110
      %p113 = scmp.ne.s32.totalorder %s96, %s112
      %p114 = scmp.eq.s32.totalorder %s20, 0
      %p115 = por %p113, %p114
      %p116 = scmp.le.s32.totalorder 1, %s14
      %p117 = scmp.lt.s32.totalorder %s14, 3
      %p118 = pnand %p116, %p117
      %p119 = pneg %p118
      // Predicated region
      $region9: #{tpu_custom_call.1} parent=5 // pred_check
        _
      $region10: #{tpu_custom_call.1} parent=5 // pred_check_branch
        %121 = sbr.rel (%p118) target = $region12
      $region11: #{tpu_custom_call.1} parent=5 // pred_region
        %s122 = ssub.s32 %s14, 1
        // Predicated region
        $region13: #{tpu_custom_call.1} parent=11 // pred_check
          %p123 = pneg %p35
        $region14: #{tpu_custom_call.1} parent=11 // pred_check_branch
          %125 = sbr.rel (%p123) target = $region16
        $region15: #{tpu_custom_call.1} parent=11 // pred_region
          %s127 = ssub.s32 32, 32
          %128 = vsyncadd [#allocation3], %s127
          %s130 = sshll.u32 [#allocation2], 4
          %s131 = int_to_ptr.vmem [resolvable:$true] %s130
          %133 = dma.hbm_to_vmem [thread:$0]  %s0, 32, %s131, [#allocation3]
        $region16: #{tpu_custom_call.1} parent=11 // pred_fallthru
          _
        // Predicated region
        $region17: #{tpu_custom_call.1} parent=11 // pred_check
          %p134 = pneg %p56
        $region18: #{tpu_custom_call.1} parent=11 // pred_check_branch
          %136 = sbr.rel (%p134) target = $region20
        $region19: #{tpu_custom_call.1} parent=11 // pred_region
          %s138 = ssub.s32 32, 32
          %139 = vsyncadd [#allocation6], %s138
          %s141 = sshll.u32 [#allocation5], 4
          %s142 = int_to_ptr.vmem [resolvable:$true] %s141
          %144 = dma.hbm_to_vmem [thread:$0]  %s1, 32, %s142, [#allocation6]
        $region20: #{tpu_custom_call.1} parent=11 // pred_fallthru
          _
      $region12: #{tpu_custom_call.1} parent=5 // pred_fallthru
        _
      %p145 = scmp.lt.s32.totalorder %s14, 2
      // Predicated region
      $region21: #{tpu_custom_call.1} parent=5 // pred_check
        %p146 = pneg %p145
      $region22: #{tpu_custom_call.1} parent=5 // pred_check_branch
        %148 = sbr.rel (%p146) target = $region24
      $region23: #{tpu_custom_call.1} parent=5 // pred_region
        // Predicated region
        $region25: #{tpu_custom_call.1} parent=23 // pred_check
          %p149 = pneg %p76
        $region26: #{tpu_custom_call.1} parent=23 // pred_check_branch
          %151 = sbr.rel (%p149) target = $region28
        $region27: #{tpu_custom_call.1} parent=23 // pred_region
          %s152 = sand.u32 %s14, 1
          %s153 = scalar_lea.sflag [#allocation3], %s152
          %s154 = sand.u32 %s66, 1
          %s155 = smul.addr %s154, 8
          %s156 = scalar_lea.vmem [#allocation7], %s155
          %s158 = ssub.s32 128, 128
          %159 = vsyncadd %s153, %s158
          %s160 = smul.addr %s14, 2
          %s161 = smul.addr %s160, 64
          %s162 = scalar_lea.hbm %s2, %s161
          %s164 = sshll.u32 %s156, 4
          %s165 = int_to_ptr.vmem [resolvable:$true] %s164
          %167 = dma.hbm_to_vmem [thread:$0]  %s162, 128, %s165, %s153
        $region28: #{tpu_custom_call.1} parent=23 // pred_fallthru
          _
      $region24: #{tpu_custom_call.1} parent=5 // pred_fallthru
        _
      %p168 = scmp.le.s32.totalorder 1, %s14
      %p169 = scmp.lt.s32.totalorder %s14, 3
      %p170 = pnand %p168, %p169
      %p171 = pneg %p170
      // Predicated region
      $region29: #{tpu_custom_call.1} parent=5 // pred_check
        _
      $region30: #{tpu_custom_call.1} parent=5 // pred_check_branch
        %173 = sbr.rel (%p170) target = $region32
      $region31: #{tpu_custom_call.1} parent=5 // pred_region
        %s174 = ssub.s32 %s14, 1
        // Predicated region
        $region33: #{tpu_custom_call.1} parent=31 // pred_check
          %p175 = pneg %p35
        $region34: #{tpu_custom_call.1} parent=31 // pred_check_branch
          %177 = sbr.rel (%p175) target = $region36
        $region35: #{tpu_custom_call.1} parent=31 // pred_region
          %178 = dma.done [#allocation3], 32
        $region36: #{tpu_custom_call.1} parent=31 // pred_fallthru
          _
        // Predicated region
        $region37: #{tpu_custom_call.1} parent=31 // pred_check
          %p179 = pneg %p56
        $region38: #{tpu_custom_call.1} parent=31 // pred_check_branch
          %181 = sbr.rel (%p179) target = $region40
        $region39: #{tpu_custom_call.1} parent=31 // pred_region
          %182 = dma.done [#allocation6], 32
        $region40: #{tpu_custom_call.1} parent=31 // pred_fallthru
          _
        %s183 = sand.u32 %s19, 1
        %s184 = scalar_lea.sflag [#allocation3], %s183
        %s185 = sand.u32 %s69, 1
        %s186 = smul.addr %s185, 8
        %s187 = scalar_lea.vmem [#allocation7], %s186
        // Predicated region
        $region41: #{tpu_custom_call.1} parent=31 // pred_check
          %p188 = pneg %p82
        $region42: #{tpu_custom_call.1} parent=31 // pred_check_branch
          %190 = sbr.rel (%p188) target = $region44
        $region43: #{tpu_custom_call.1} parent=31 // pred_region
          %191 = dma.done %s184, 128
        $region44: #{tpu_custom_call.1} parent=31 // pred_fallthru
          _
        %p192 = pneg %p35
        %p193 = pneg %p32
        %p194 = pneg %p56
        %p195 = pneg %p53
        %s196 = sand.u32 %s19, 1
        %s197 = scalar_lea.sflag [#allocation3], %s196
        %s198 = sand.u32 %s69, 1
        %s199 = smul.addr %s198, 8
        %s200 = scalar_lea.vmem [#allocation7], %s199
        %p201 = pneg %p82
        %p202 = pneg %p79
        %p203 = pneg %p108
        %p204 = pneg %p105
        %s205 = sand.u32 %s95, 1
        %s206 = scalar_lea.sflag [#allocation4], %s205
        %s207 = sand.u32 %s95, 1
        %s208 = smul.addr %s207, 2
        %s209 = scalar_lea.vmem [#allocation8], %s208
        %v210 = vld [vmem:[%s187] sm:$0xff]
        %v211 = vmax.f32 %v210, 0.0
        %v212 = vld [vmem:[#allocation2] sm:$0x3]
        %v213 = vld [vmem:[#allocation5] sm:$0x3]
        %v215 = vcombine.high %v211, %v211
        %vm217 = vcmask 1043456
        %v218 = vsel %vm217, %v211, 0.0
        %v219 = vsel %vm217, %v215, 0.0
        %v220 = vadd.f32 %v218, %v219
        %221 = vadd.xlane.f32.xlu0 %v220
        %v222 = vpop.xlane.xlu0 %221
        %v223 = vadd.f32 %v222, 1e-08
        %v225 = vlaneseq
        %v226 = vshrl.u32 %v225, 7
        %v227 = vsub.s32 0, %v226
        %v228 = vrot.slane %v212, %v227
        %v229 = vlaneseq
        %v230 = vshrl.u32 %v229, 7
        %v231 = vsub.s32 1, %v230
        %v232 = vrot.slane %v212, %v231
        %v233 = vcombine.low %v228, %v232
        %v235 = vmul.f32 %v211, %v233
        %v237 = vcombine.high %v235, %v235
        %v239 = vsel %vm217, %v235, 0.0
        %v240 = vsel %vm217, %v237, 0.0
        %v241 = vadd.f32 %v239, %v240
        %242 = vadd.xlane.f32.xlu0 %v241
        %v243 = vpop.xlane.xlu0 %242
        %v245 = vlaneseq
        %v246 = vshrl.u32 %v245, 7
        %v247 = vsub.s32 0, %v246
        %v248 = vrot.slane %v213, %v247
        %v249 = vlaneseq
        %v250 = vshrl.u32 %v249, 7
        %v251 = vsub.s32 1, %v250
        %v252 = vrot.slane %v213, %v251
        %v253 = vcombine.low %v248, %v252
        %v255 = vmul.f32 %v211, %v253
        %v257 = vcombine.high %v255, %v255
        %v259 = vsel %vm217, %v255, 0.0
        %v260 = vsel %vm217, %v257, 0.0
        %v261 = vadd.f32 %v259, %v260
        %262 = vadd.xlane.f32.xlu0 %v261
        %v263 = vpop.xlane.xlu0 %262
        %v264 = vrcp.pop %v223
        %v265 = vmul.f32 1.0, %v264
        %v266 = vmul.f32 %v243, %v265
        %v267 = vmul.f32 %v266, 2.0
        %v268 = vsub.f32 %v267, 1.0
        %v269 = vmul.f32 %v263, %v265
        %v270 = vmul.f32 %v269, 2.0
        %v271 = vsub.f32 %v270, 1.0
        %v273 = vlaneseq
        %v274 = vand.u32 %v273, 127
        %v275 = vlaneseq
        %v276 = vshrl.u32 %v275, 7
        %v277 = vsub.s32 %v274, %v276
        %v278 = vrot.slane %v268, %v277
        %v281 = vlaneseq
        %v282 = vshrl.u32 %v281, 7
        %v283 = vsub.s32 %v274, %v282
        %v284 = vrot.slane %v271, %v283
        %vm286 = vcmask 1040384
        %v287 = vsel %vm286, %v278, %v284
        %vm288 = vcmask 25600
        %289 = vst.msk [vmem:[%s209] sm:$0x3] %vm288, %v287
        %s290 = sand.u32 %s95, 1
        %s291 = scalar_lea.sflag [#allocation4], %s290
        %s292 = sand.u32 %s95, 1
        %s293 = smul.addr %s292, 2
        %s294 = scalar_lea.vmem [#allocation8], %s293
        // Predicated region
        $region45: #{tpu_custom_call.1} parent=31 // pred_check
          %p295 = pneg %p105
        $region46: #{tpu_custom_call.1} parent=31 // pred_check_branch
          %297 = sbr.rel (%p295) target = $region48
        $region47: #{tpu_custom_call.1} parent=31 // pred_region
          %s299 = ssub.s32 32, 32
          %300 = vsyncadd %s291, %s299
          %s301 = smul.addr %s19, 32
          %s302 = scalar_lea.hbm %s3, %s301
          %s304 = sshll.u32 %s294, 4
          %s305 = int_to_ptr.vmem [resolvable:$true] %s304
          %307 = dma.vmem_to_hbm [thread:$0]  %s305, 32, %s302, %s291
        $region48: #{tpu_custom_call.1} parent=31 // pred_fallthru
          _
      $region32: #{tpu_custom_call.1} parent=5 // pred_fallthru
        _
      %p308 = scmp.le.s32.totalorder 2, %s14
      // Predicated region
      $region49: #{tpu_custom_call.1} parent=5 // pred_check
        %p309 = pneg %p308
      $region50: #{tpu_custom_call.1} parent=5 // pred_check_branch
        %311 = sbr.rel (%p309) target = $region52
      $region51: #{tpu_custom_call.1} parent=5 // pred_region
        %s312 = ssub.s32 %s14, 2
        // Predicated region
        $region53: #{tpu_custom_call.1} parent=51 // pred_check
          %p313 = pneg %p111
        $region54: #{tpu_custom_call.1} parent=51 // pred_check_branch
          %315 = sbr.rel (%p313) target = $region56
        $region55: #{tpu_custom_call.1} parent=51 // pred_region
          %s316 = sand.u32 %s96, 1
          %s317 = scalar_lea.sflag [#allocation4], %s316
          %s318 = sand.u32 %s96, 1
          %s319 = smul.addr %s318, 2
          %s320 = scalar_lea.vmem [#allocation8], %s319
          %321 = dma.done %s317, 32
        $region56: #{tpu_custom_call.1} parent=51 // pred_fallthru
          _
      $region52: #{tpu_custom_call.1} parent=5 // pred_fallthru
        _
    $region6: #{tpu_custom_call.1} parent=1 // loop_footer
      %s18 = sadd.s32 1, %s14
    $region7: #{tpu_custom_call.1} parent=1 // loop_footer_branch
      %13 = sbr.rel target = $region3
    $region8: #{tpu_custom_call.1} parent=1 // loop_exit
      _
    %322 = vsyncpa [#allocation3], 1
    %s323 = scalar_lea.sflag [#allocation3], 1
    %324 = vsyncpa %s323, 1
    %325 = vsyncpa [#allocation6], 1
    %326 = vsyncpa [#allocation4], 1
    %s327 = scalar_lea.sflag [#allocation4], 1
    %328 = vsyncpa %s327, 1

</llo_original>
